<compile_context>
chip_gen: v6e
topology: v6e:2x2x1
jax: 0.10.0
libtpu: 0.0.40
codegen_flags: <defaults>
</compile_context>

<pallas_src>
import jax
import jax.numpy as jnp
from jax import lax
from jax.experimental import pallas as pl
from jax.experimental.pallas import tpu as pltpu

LANE = 128


def _round_up(v, m):
    return ((v + m - 1) // m) * m


def _pad_to(a, shape):
    pads = [(0, t - s) for s, t in zip(a.shape, shape)]
    return jnp.pad(a, pads)


def _vae_forward_kernel(x_ref, eps_ref,
                        w_enc_ref, b_enc_ref,
                        w_mulv_ref, b_mulv_ref,
                        w_d1_ref, b_d1_ref,
                        w_d2_ref, b_d2_ref,
                        xt_ref, kld_ref):
    x = x_ref[...]           # (TB, Din_p)  bf16
    eps = eps_ref[...]       # (TB, Dz_p)   f32

    # ---- encoder: Linear + LeakyReLU(0.2) (single vmax) ----
    h = jnp.dot(x, w_enc_ref[...], preferred_element_type=jnp.float32) + b_enc_ref[...]
    h = jnp.maximum(h, 0.2 * h)

    # ---- fused bottleneck projection: [mu | logvar] in one matmul ----
    ml = jnp.dot(h.astype(jnp.bfloat16), w_mulv_ref[...],
                 preferred_element_type=jnp.float32) + b_mulv_ref[...]
    zp = ml.shape[-1] // 2                    # padded z_dim (multiple of 128)
    mu = ml[:, :zp]
    logvar = ml[:, zp:]

    # ---- reparametrize: std = softplus(logvar) + 1e-5, sharing one exp ----
    # stable softplus: max(x,0) + log1p(exp(-|x|)), with exp(-|x|) = min(e, 1/e)
    e = jnp.exp(logvar)                       # also used by the KL term
    softplus = jnp.maximum(logvar, 0.0) + jnp.log1p(jnp.minimum(e, 1.0 / e))
    std = softplus + 1e-5
    z = mu + eps * std

    # ---- analytic KL (flow_model is None) ----
    # Reduce over z on the MXU against a ones matrix so the per-row KL lands
    # with batch on the lane axis → fully dense (8, TB) store, no masking.
    # (zero-padded z columns contribute exactly 0: 1 + 0 - 0 - exp(0) = 0)
    term = 1.0 + logvar - mu * mu - e                         # (TB, Zp) f32
    ones8 = jnp.ones((8, zp), jnp.float32)
    kld = -0.5 * lax.dot_general(ones8, term, (((1,), (1,)), ((), ())),
                                 preferred_element_type=jnp.float32)  # (8, TB)
    kld_ref[...] = kld.reshape(kld_ref.shape)

    # ---- decoder: Linear + LeakyReLU(0.2) + Linear ----
    d = jnp.dot(z.astype(jnp.bfloat16), w_d1_ref[...],
                preferred_element_type=jnp.float32) + b_d1_ref[...]
    d = jnp.maximum(d, 0.2 * d)
    x_tilde = jnp.dot(d.astype(jnp.bfloat16), w_d2_ref[...],
                      preferred_element_type=jnp.float32) + b_d2_ref[...]
    xt_ref[...] = x_tilde


def feedforward_vae_forward(x, eps, params):
    """Full forward pass in one Pallas kernel, gridded over the batch."""
    B, input_dim = x.shape
    hidden_dim = params["w_enc"].shape[1]
    z_dim = params["w_mu"].shape[1]

    dp_in = _round_up(input_dim, LANE)
    dp_h = _round_up(hidden_dim, LANE)
    dp_z = _round_up(z_dim, LANE)

    # Batch tile: 256 rows for real batches (well under v7x's 64 MiB VMEM even
    # with double-buffered x/eps/x_tilde blocks), otherwise just the whole
    # (8-aligned) batch.
    tile_b = 256 if B >= 256 else _round_up(B, 8)
    b_pad = _round_up(B, tile_b)
    num_tiles = b_pad // tile_b

    # ---- wrapper-side layout plumbing: pad, fuse, cast ----
    x_p = _pad_to(x, (b_pad, dp_in)).astype(jnp.bfloat16)
    eps_p = _pad_to(eps, (b_pad, dp_z)).astype(jnp.float32)

    w_enc = _pad_to(params["w_enc"], (dp_in, dp_h)).astype(jnp.bfloat16)
    b_enc = _pad_to(params["b_enc"], (1, dp_h)).astype(jnp.float32)
    w_mulv = jnp.concatenate(
        [_pad_to(params["w_mu"], (dp_h, dp_z)),
         _pad_to(params["w_lv"], (dp_h, dp_z))], axis=1).astype(jnp.bfloat16)
    b_mulv = jnp.concatenate(
        [_pad_to(params["b_mu"], (1, dp_z)),
         _pad_to(params["b_lv"], (1, dp_z))], axis=1).astype(jnp.float32)
    w_d1 = _pad_to(params["w_d1"], (dp_z, dp_h)).astype(jnp.bfloat16)
    b_d1 = _pad_to(params["b_d1"], (1, dp_h)).astype(jnp.float32)
    w_d2 = _pad_to(params["w_d2"], (dp_h, dp_in)).astype(jnp.bfloat16)
    b_d2 = _pad_to(params["b_d2"], (1, dp_in)).astype(jnp.float32)

    in_specs = [
        pl.BlockSpec((tile_b, dp_in), lambda i: (i, 0)),        # x
        pl.BlockSpec((tile_b, dp_z), lambda i: (i, 0)),         # eps
        pl.BlockSpec((dp_in, dp_h), lambda i: (0, 0)),          # w_enc (resident)
        pl.BlockSpec((1, dp_h), lambda i: (0, 0)),              # b_enc
        pl.BlockSpec((dp_h, 2 * dp_z), lambda i: (0, 0)),       # w_mu|w_lv
        pl.BlockSpec((1, 2 * dp_z), lambda i: (0, 0)),          # b_mu|b_lv
        pl.BlockSpec((dp_z, dp_h), lambda i: (0, 0)),           # w_d1
        pl.BlockSpec((1, dp_h), lambda i: (0, 0)),              # b_d1
        pl.BlockSpec((dp_h, dp_in), lambda i: (0, 0)),          # w_d2
        pl.BlockSpec((1, dp_in), lambda i: (0, 0)),             # b_d2
    ]
    out_specs = (
        pl.BlockSpec((tile_b, dp_in), lambda i: (i, 0)),        # x_tilde (lane-dense)
        pl.BlockSpec((1, 8, tile_b), lambda i: (i, 0, 0)),      # kld, batch on lanes
    )

    w_bytes = 2 * (dp_in * dp_h + dp_h * 2 * dp_z + dp_z * dp_h + dp_h * dp_in) \
        + 4 * (dp_h + 2 * dp_z + dp_h + dp_in)
    cost = pl.CostEstimate(
        flops=2 * b_pad * (dp_in * dp_h + dp_h * 2 * dp_z + dp_z * dp_h
                           + dp_h * dp_in + 8 * dp_z),
        transcendentals=2 * b_pad * dp_z,
        bytes_accessed=(b_pad * dp_in * 2 + b_pad * dp_z * 4 + w_bytes
                        + b_pad * dp_in * 4 + num_tiles * 8 * tile_b * 4),
    )

    xt_p, kld_p = pl.pallas_call(
        _vae_forward_kernel,
        grid=(num_tiles,),
        in_specs=in_specs,
        out_specs=out_specs,
        out_shape=(
            jax.ShapeDtypeStruct((b_pad, dp_in), jnp.float32),
            jax.ShapeDtypeStruct((num_tiles, 8, tile_b), jnp.float32),
        ),
        compiler_params=pltpu.CompilerParams(
            dimension_semantics=("parallel",)),
        cost_estimate=cost,
    )(x_p, eps_p, w_enc, b_enc, w_mulv, b_mulv, w_d1, b_d1, w_d2, b_d2)

    x_tilde = xt_p[:B, :input_dim]
    kld = kld_p[:, 0, :].reshape(b_pad)[:B]        # PyTorch returns shape (B,)
    return x_tilde, kld


def _reference_forward(x, eps, params):
    """Pure-JAX f32 reference of the PyTorch forward (flow_model=None)."""
    h = x @ params["w_enc"] + params["b_enc"]
    h = jnp.where(h > 0, h, 0.2 * h)
    mu = h @ params["w_mu"] + params["b_mu"]
    logvar = h @ params["w_lv"] + params["b_lv"]
    std = jax.nn.softplus(logvar) + 1e-5
    z = mu + eps * std
    kld = -0.5 * jnp.sum(1.0 + logvar - mu * mu - jnp.exp(logvar), axis=1)
    d = z @ params["w_d1"] + params["b_d1"]
    d = jnp.where(d > 0, d, 0.2 * d)
    x_tilde = d @ params["w_d2"] + params["b_d2"]
    return x_tilde, kld


def init_params(key, input_dim, hidden_dim, z_dim):
    """Deterministic synthetic parameters (same shapes as the nn.Linear layers)."""
    keys = jax.random.split(key, 6)
    scale = 0.1

    def lin(k, fan_in, fan_out):
        kw, kb = jax.random.split(k)
        w = scale * jax.random.normal(kw, (fan_in, fan_out), jnp.float32)
        b = scale * jax.random.normal(kb, (1, fan_out), jnp.float32)
        return w, b

    w_enc, b_enc = lin(keys[0], input_dim, hidden_dim)
    w_mu, b_mu = lin(keys[1], hidden_dim, z_dim)
    w_lv, b_lv = lin(keys[2], hidden_dim, z_dim)
    w_d1, b_d1 = lin(keys[3], z_dim, hidden_dim)
    w_d2, b_d2 = lin(keys[4], hidden_dim, input_dim)

    return dict(w_enc=w_enc, b_enc=b_enc,
                w_mu=w_mu, b_mu=b_mu,
                w_lv=w_lv, b_lv=b_lv,
                w_d1=w_d1, b_d1=b_d1,
                w_d2=w_d2, b_d2=b_d2)


if __name__ == "__main__":
    # Small shapes consistent with the FeedForwardVAE constructor.
    B, input_dim, hidden_dim, z_dim = 8, 64, 32, 16

    key = jax.random.PRNGKey(0)
    k_x, k_eps, k_params = jax.random.split(key, 3)

    x = jax.random.normal(k_x, (B, input_dim), jnp.float32)
    # eps plays the role of torch.randn_like(std) in reparametrize — supplied
    # explicitly so the kernel is deterministic.
    eps = jax.random.normal(k_eps, (B, z_dim), jnp.float32)
    params = init_params(k_params, input_dim, hidden_dim, z_dim)

    fwd = jax.jit(feedforward_vae_forward)
    x_tilde, kld = fwd(x, eps, params)
    jax.block_until_ready((x_tilde, kld))

    assert x_tilde.shape == (B, input_dim)
    assert kld.shape == (B,)
    assert bool(jnp.all(jnp.isfinite(x_tilde))) and bool(jnp.all(jnp.isfinite(kld)))

    # Loose-tolerance check vs. an f32 reference (kernel uses bf16 matmul
    # operands with f32 accumulation).
    xt_ref, kld_ref = _reference_forward(x, eps, params)
    assert float(jnp.max(jnp.abs(x_tilde - xt_ref))) < 1e-1
    assert float(jnp.max(jnp.abs(kld - kld_ref))) < 1e-1

    print("KERNEL_OK")
</pallas_src>

<mosaic_0001>
module attributes {stable_mosaic.version = 11 : i64} {
  func.func @_vae_forward_kernel(%arg0: i32, %arg1: memref<8x128xbf16, #tpu.memory_space<vmem>>, %arg2: memref<8x128xf32, #tpu.memory_space<vmem>>, %arg3: memref<128x128xbf16, #tpu.memory_space<vmem>>, %arg4: memref<1x128xf32, #tpu.memory_space<vmem>>, %arg5: memref<128x256xbf16, #tpu.memory_space<vmem>>, %arg6: memref<1x256xf32, #tpu.memory_space<vmem>>, %arg7: memref<128x128xbf16, #tpu.memory_space<vmem>>, %arg8: memref<1x128xf32, #tpu.memory_space<vmem>>, %arg9: memref<128x128xbf16, #tpu.memory_space<vmem>>, %arg10: memref<1x128xf32, #tpu.memory_space<vmem>>, %arg11: memref<8x128xf32, #tpu.memory_space<vmem>>, %arg12: memref<1x8x8xf32, #tpu.memory_space<vmem>>) attributes {dimension_semantics = [#tpu.dimension_semantics<parallel>], iteration_bounds = array<i64: 1>, scalar_prefetch = 0 : i64, scratch_operands = 0 : i64, tpu.core_type = #tpu.core_type<tc>, window_params = [{transform_indices = @transform_0, window_bounds = array<i64: 8, 128>}, {transform_indices = @transform_1, window_bounds = array<i64: 8, 128>}, {pipeline_mode = #tpu.pipeline_mode<synchronous>, transform_indices = @transform_2, window_bounds = array<i64: 128, 128>}, {pipeline_mode = #tpu.pipeline_mode<synchronous>, transform_indices = @transform_3, window_bounds = array<i64: 1, 128>}, {pipeline_mode = #tpu.pipeline_mode<synchronous>, transform_indices = @transform_4, window_bounds = array<i64: 128, 256>}, {pipeline_mode = #tpu.pipeline_mode<synchronous>, transform_indices = @transform_5, window_bounds = array<i64: 1, 256>}, {pipeline_mode = #tpu.pipeline_mode<synchronous>, transform_indices = @transform_6, window_bounds = array<i64: 128, 128>}, {pipeline_mode = #tpu.pipeline_mode<synchronous>, transform_indices = @transform_7, window_bounds = array<i64: 1, 128>}, {pipeline_mode = #tpu.pipeline_mode<synchronous>, transform_indices = @transform_8, window_bounds = array<i64: 128, 128>}, {pipeline_mode = #tpu.pipeline_mode<synchronous>, transform_indices = @transform_9, window_bounds = array<i64: 1, 128>}, {transform_indices = @transform_10, window_bounds = array<i64: 8, 128>}, {transform_indices = @transform_11, window_bounds = array<i64: 1, 8, 8>}]} {
    %c0 = arith.constant 0 : index
    %c0_0 = arith.constant 0 : index
    %0 = vector.load %arg1[%c0, %c0_0] : memref<8x128xbf16, #tpu.memory_space<vmem>>, vector<8x128xbf16>
    %c0_1 = arith.constant 0 : index
    %c0_2 = arith.constant 0 : index
    %1 = vector.load %arg2[%c0_1, %c0_2] : memref<8x128xf32, #tpu.memory_space<vmem>>, vector<8x128xf32>
    %c0_3 = arith.constant 0 : index
    %c0_4 = arith.constant 0 : index
    %2 = vector.load %arg3[%c0_3, %c0_4] : memref<128x128xbf16, #tpu.memory_space<vmem>>, vector<128x128xbf16>
    %cst = arith.constant dense<0.000000e+00> : vector<8x128xf32>
    %3 = tpu.matmul %0, %2, %cst {dimension_numbers = #tpu.dot_dimension_numbers<[1], [0], [0], [1], [0, 0, 1, 1], [], []>} : vector<8x128xbf16>, vector<128x128xbf16>, vector<8x128xf32> -> vector<8x128xf32>
    %c0_5 = arith.constant 0 : index
    %c0_6 = arith.constant 0 : index
    %4 = vector.load %arg4[%c0_5, %c0_6] : memref<1x128xf32, #tpu.memory_space<vmem>>, vector<1x128xf32>
    %5 = vector.broadcast %4 : vector<1x128xf32> to vector<8x128xf32>
    %6 = arith.addf %3, %5 : vector<8x128xf32>
    %cst_7 = arith.constant 2.000000e-01 : f32
    %7 = vector.broadcast %cst_7 : f32 to vector<8x128xf32>
    %8 = arith.mulf %7, %6 : vector<8x128xf32>
    %9 = arith.maximumf %6, %8 : vector<8x128xf32>
    %10 = arith.truncf %9 : vector<8x128xf32> to vector<8x128xbf16>
    %c0_8 = arith.constant 0 : index
    %c0_9 = arith.constant 0 : index
    %11 = vector.load %arg5[%c0_8, %c0_9] : memref<128x256xbf16, #tpu.memory_space<vmem>>, vector<128x256xbf16>
    %cst_10 = arith.constant dense<0.000000e+00> : vector<8x256xf32>
    %12 = tpu.matmul %10, %11, %cst_10 {dimension_numbers = #tpu.dot_dimension_numbers<[1], [0], [0], [1], [0, 0, 1, 1], [], []>} : vector<8x128xbf16>, vector<128x256xbf16>, vector<8x256xf32> -> vector<8x256xf32>
    %c0_11 = arith.constant 0 : index
    %c0_12 = arith.constant 0 : index
    %13 = vector.load %arg6[%c0_11, %c0_12] : memref<1x256xf32, #tpu.memory_space<vmem>>, vector<1x256xf32>
    %14 = vector.broadcast %13 : vector<1x256xf32> to vector<8x256xf32>
    %15 = arith.addf %12, %14 : vector<8x256xf32>
    %16 = vector.extract_strided_slice %15 {offsets = [0, 0], sizes = [8, 128], strides = [1, 1]} : vector<8x256xf32> to vector<8x128xf32>
    %17 = vector.extract_strided_slice %15 {offsets = [0, 128], sizes = [8, 128], strides = [1, 1]} : vector<8x256xf32> to vector<8x128xf32>
    %18 = math.exp %17 : vector<8x128xf32>
    %cst_13 = arith.constant 0.000000e+00 : f32
    %19 = vector.broadcast %cst_13 : f32 to vector<8x128xf32>
    %20 = arith.maximumf %17, %19 : vector<8x128xf32>
    %cst_14 = arith.constant 1.000000e+00 : f32
    %21 = vector.broadcast %cst_14 : f32 to vector<8x128xf32>
    %22 = arith.divf %21, %18 : vector<8x128xf32>
    %23 = arith.minimumf %18, %22 : vector<8x128xf32>
    %24 = math.log1p %23 : vector<8x128xf32>
    %25 = arith.addf %20, %24 : vector<8x128xf32>
    %cst_15 = arith.constant 9.99999974E-6 : f32
    %26 = vector.broadcast %cst_15 : f32 to vector<8x128xf32>
    %27 = arith.addf %25, %26 : vector<8x128xf32>
    %28 = arith.mulf %1, %27 : vector<8x128xf32>
    %29 = arith.addf %16, %28 : vector<8x128xf32>
    %cst_16 = arith.constant 1.000000e+00 : f32
    %30 = vector.broadcast %cst_16 : f32 to vector<8x128xf32>
    %31 = arith.addf %30, %17 : vector<8x128xf32>
    %32 = arith.mulf %16, %16 : vector<8x128xf32>
    %33 = arith.subf %31, %32 : vector<8x128xf32>
    %34 = arith.subf %33, %18 : vector<8x128xf32>
    %cst_17 = arith.constant 1.000000e+00 : f32
    %35 = vector.broadcast %cst_17 : f32 to vector<8x128xf32>
    %cst_18 = arith.constant dense<0.000000e+00> : vector<8x8xf32>
    %36 = tpu.matmul %35, %34, %cst_18 {dimension_numbers = #tpu.dot_dimension_numbers<[1], [1], [0], [0], [0, 0, 1, 0], [], []>} : vector<8x128xf32>, vector<8x128xf32>, vector<8x8xf32> -> vector<8x8xf32>
    %cst_19 = arith.constant -5.000000e-01 : f32
    %37 = vector.broadcast %cst_19 : f32 to vector<8x8xf32>
    %38 = arith.mulf %37, %36 : vector<8x8xf32>
    %39 = vector.shape_cast %38 : vector<8x8xf32> to vector<1x8x8xf32>
    %c0_20 = arith.constant 0 : index
    %c0_21 = arith.constant 0 : index
    %c0_22 = arith.constant 0 : index
    %40 = vector.load %arg12[%c0_20, %c0_21, %c0_22] : memref<1x8x8xf32, #tpu.memory_space<vmem>>, vector<1x8x8xf32>
    tpu.vector_store %arg12[%c0_20, %c0_21, %c0_22], %39 {strides = array<i32>} : memref<1x8x8xf32, #tpu.memory_space<vmem>>, vector<1x8x8xf32>,
    %41 = arith.truncf %29 : vector<8x128xf32> to vector<8x128xbf16>
    %c0_23 = arith.constant 0 : index
    %c0_24 = arith.constant 0 : index
    %42 = vector.load %arg7[%c0_23, %c0_24] : memref<128x128xbf16, #tpu.memory_space<vmem>>, vector<128x128xbf16>
    %cst_25 = arith.constant dense<0.000000e+00> : vector<8x128xf32>
    %43 = tpu.matmul %41, %42, %cst_25 {dimension_numbers = #tpu.dot_dimension_numbers<[1], [0], [0], [1], [0, 0, 1, 1], [], []>} : vector<8x128xbf16>, vector<128x128xbf16>, vector<8x128xf32> -> vector<8x128xf32>
    %c0_26 = arith.constant 0 : index
    %c0_27 = arith.constant 0 : index
    %44 = vector.load %arg8[%c0_26, %c0_27] : memref<1x128xf32, #tpu.memory_space<vmem>>, vector<1x128xf32>
    %45 = vector.broadcast %44 : vector<1x128xf32> to vector<8x128xf32>
    %46 = arith.addf %43, %45 : vector<8x128xf32>
    %cst_28 = arith.constant 2.000000e-01 : f32
    %47 = vector.broadcast %cst_28 : f32 to vector<8x128xf32>
    %48 = arith.mulf %47, %46 : vector<8x128xf32>
    %49 = arith.maximumf %46, %48 : vector<8x128xf32>
    %50 = arith.truncf %49 : vector<8x128xf32> to vector<8x128xbf16>
    %c0_29 = arith.constant 0 : index
    %c0_30 = arith.constant 0 : index
    %51 = vector.load %arg9[%c0_29, %c0_30] : memref<128x128xbf16, #tpu.memory_space<vmem>>, vector<128x128xbf16>
    %cst_31 = arith.constant dense<0.000000e+00> : vector<8x128xf32>
    %52 = tpu.matmul %50, %51, %cst_31 {dimension_numbers = #tpu.dot_dimension_numbers<[1], [0], [0], [1], [0, 0, 1, 1], [], []>} : vector<8x128xbf16>, vector<128x128xbf16>, vector<8x128xf32> -> vector<8x128xf32>
    %c0_32 = arith.constant 0 : index
    %c0_33 = arith.constant 0 : index
    %53 = vector.load %arg10[%c0_32, %c0_33] : memref<1x128xf32, #tpu.memory_space<vmem>>, vector<1x128xf32>
    %54 = vector.broadcast %53 : vector<1x128xf32> to vector<8x128xf32>
    %55 = arith.addf %52, %54 : vector<8x128xf32>
    %c0_34 = arith.constant 0 : index
    %c0_35 = arith.constant 0 : index
    %56 = vector.load %arg11[%c0_34, %c0_35] : memref<8x128xf32, #tpu.memory_space<vmem>>, vector<8x128xf32>
    tpu.vector_store %arg11[%c0_34, %c0_35], %55 {strides = array<i32>} : memref<8x128xf32, #tpu.memory_space<vmem>>, vector<8x128xf32>,
    return
  }
  func.func @transform_0(%arg0: i32) -> (i32, i32) {
    %c0_i32 = arith.constant 0 : i32
    %c0_i32_0 = arith.constant 0 : i32
    return %arg0, %c0_i32 : i32, i32
  }
  func.func @transform_1(%arg0: i32) -> (i32, i32) {
    %c0_i32 = arith.constant 0 : i32
    %c0_i32_0 = arith.constant 0 : i32
    return %arg0, %c0_i32 : i32, i32
  }
  func.func @transform_2(%arg0: i32) -> (i32, i32) {
    %c0_i32 = arith.constant 0 : i32
    %c0_i32_0 = arith.constant 0 : i32
    %c0_i32_1 = arith.constant 0 : i32
    return %c0_i32, %c0_i32_0 : i32, i32
  }
  func.func @transform_3(%arg0: i32) -> (i32, i32) {
    %c0_i32 = arith.constant 0 : i32
    %c0_i32_0 = arith.constant 0 : i32
    %c0_i32_1 = arith.constant 0 : i32
    return %c0_i32, %c0_i32_0 : i32, i32
  }
  func.func @transform_4(%arg0: i32) -> (i32, i32) {
    %c0_i32 = arith.constant 0 : i32
    %c0_i32_0 = arith.constant 0 : i32
    %c0_i32_1 = arith.constant 0 : i32
    return %c0_i32, %c0_i32_0 : i32, i32
  }
  func.func @transform_5(%arg0: i32) -> (i32, i32) {
    %c0_i32 = arith.constant 0 : i32
    %c0_i32_0 = arith.constant 0 : i32
    %c0_i32_1 = arith.constant 0 : i32
    return %c0_i32, %c0_i32_0 : i32, i32
  }
  func.func @transform_6(%arg0: i32) -> (i32, i32) {
    %c0_i32 = arith.constant 0 : i32
    %c0_i32_0 = arith.constant 0 : i32
    %c0_i32_1 = arith.constant 0 : i32
    return %c0_i32, %c0_i32_0 : i32, i32
  }
  func.func @transform_7(%arg0: i32) -> (i32, i32) {
    %c0_i32 = arith.constant 0 : i32
    %c0_i32_0 = arith.constant 0 : i32
    %c0_i32_1 = arith.constant 0 : i32
    return %c0_i32, %c0_i32_0 : i32, i32
  }
  func.func @transform_8(%arg0: i32) -> (i32, i32) {
    %c0_i32 = arith.constant 0 : i32
    %c0_i32_0 = arith.constant 0 : i32
    %c0_i32_1 = arith.constant 0 : i32
    return %c0_i32, %c0_i32_0 : i32, i32
  }
  func.func @transform_9(%arg0: i32) -> (i32, i32) {
    %c0_i32 = arith.constant 0 : i32
    %c0_i32_0 = arith.constant 0 : i32
    %c0_i32_1 = arith.constant 0 : i32
    return %c0_i32, %c0_i32_0 : i32, i32
  }
  func.func @transform_10(%arg0: i32) -> (i32, i32) {
    %c0_i32 = arith.constant 0 : i32
    %c0_i32_0 = arith.constant 0 : i32
    return %arg0, %c0_i32 : i32, i32
  }
  func.func @transform_11(%arg0: i32) -> (i32, i32, i32) {
    %c0_i32 = arith.constant 0 : i32
    %c0_i32_0 = arith.constant 0 : i32
    %c0_i32_1 = arith.constant 0 : i32
    return %arg0, %c0_i32, %c0_i32_0 : i32, i32, i32
  }
}

</mosaic_0001>

<llo_original>
// kernel: feedforward_vae_forward.1
$region0: #{feedforward_vae_forward.1}
  #allocation0 [shape = 'u32[]', space=smem, size = 0x4, offset = 0x4, fixed_abs, tag = 'smem constant byte address 0x4 - core index']
  #allocation1 [shape = 'u32[144,128]{1,0:T(1,128)}', space=vmem, size = 0x12000, scoped, tag = 'internal scratch']
  %s0 = inlined_call_operand.vmem [shape: bf16[8,128], index: 0, kind: input, shape index: {}]
  %s1 = inlined_call_operand.vmem [shape: f32[8,128], index: 1, kind: input, shape index: {}]
  %s2 = inlined_call_operand.vmem [shape: bf16[128,128], index: 2, kind: input, shape index: {}]
  %s3 = inlined_call_operand.vmem [shape: f32[1,128], index: 3, kind: input, shape index: {}]
  %s4 = inlined_call_operand.vmem [shape: bf16[128,256], index: 4, kind: input, shape index: {}]
  %s5 = inlined_call_operand.vmem [shape: f32[1,256], index: 5, kind: input, shape index: {}]
  %s6 = inlined_call_operand.vmem [shape: bf16[128,128], index: 6, kind: input, shape index: {}]
  %s7 = inlined_call_operand.vmem [shape: f32[1,128], index: 7, kind: input, shape index: {}]
  %s8 = inlined_call_operand.vmem [shape: bf16[128,128], index: 8, kind: input, shape index: {}]
  %s9 = inlined_call_operand.vmem [shape: f32[1,128], index: 9, kind: input, shape index: {}]
  %s10 = inlined_call_operand.hbm [shape: f32[8,128], index: 10, kind: output, shape index: {0}]
  %s11 = inlined_call_operand.vmem [shape: f32[1,8,8], index: 11, kind: output, shape index: {1}]
  %12 = xla_tuple %s10, %s11
  %s13 = sld [smem:[#allocation0]]
  $region58: #{feedforward_vae_forward.1} parent=0
    _
  %s15 = ssub.s32 1, %s13
  %s16 = scalar_select 0, %s15, %s13
  $region1: #{feedforward_vae_forward.1} parent=0
    #allocation2 [shape = 'u8[4096]{0}', space=vmem, size = 0x1000, scoped, tag = 'output window, operand 0, single buffered']
    #allocation3 [shape = 's32[1]{0}', space=sflag, size = 0x4, scoped, tag = 'scoped memory for feedforward_vae_forward.1']
    %17 = vsyncpa [#allocation3], 0
    // Predicated region
    $region2: #{feedforward_vae_forward.1} parent=1 // pred_check
      _
    $region3: #{feedforward_vae_forward.1} parent=1 // pred_check_branch
      %19 = sbr.rel (0) target = $region5
    $region4: #{feedforward_vae_forward.1} parent=1 // pred_region
      _
    $region5: #{feedforward_vae_forward.1} parent=1 // pred_fallthru
      _
    // Predicated region
    $region6: #{feedforward_vae_forward.1} parent=1 // pred_check
      _
    $region7: #{feedforward_vae_forward.1} parent=1 // pred_check_branch
      %21 = sbr.rel (0) target = $region9
    $region8: #{feedforward_vae_forward.1} parent=1 // pred_region
      _
    $region9: #{feedforward_vae_forward.1} parent=1 // pred_fallthru
      _
    // Predicated region
    $region10: #{feedforward_vae_forward.1} parent=1 // pred_check
      _
    $region11: #{feedforward_vae_forward.1} parent=1 // pred_check_branch
      %23 = sbr.rel (0) target = $region13
    $region12: #{feedforward_vae_forward.1} parent=1 // pred_region
      _
    $region13: #{feedforward_vae_forward.1} parent=1 // pred_fallthru
      _
    // Predicated region
    $region14: #{feedforward_vae_forward.1} parent=1 // pred_check
      _
    $region15: #{feedforward_vae_forward.1} parent=1 // pred_check_branch
      %25 = sbr.rel (0) target = $region17
    $region16: #{feedforward_vae_forward.1} parent=1 // pred_region
      _
    $region17: #{feedforward_vae_forward.1} parent=1 // pred_fallthru
      _
    // Predicated region
    $region18: #{feedforward_vae_forward.1} parent=1 // pred_check
      _
    $region19: #{feedforward_vae_forward.1} parent=1 // pred_check_branch
      %27 = sbr.rel (0) target = $region21
    $region20: #{feedforward_vae_forward.1} parent=1 // pred_region
      _
    $region21: #{feedforward_vae_forward.1} parent=1 // pred_fallthru
      _
    // Predicated region
    $region22: #{feedforward_vae_forward.1} parent=1 // pred_check
      _
    $region23: #{feedforward_vae_forward.1} parent=1 // pred_check_branch
      %29 = sbr.rel (0) target = $region25
    $region24: #{feedforward_vae_forward.1} parent=1 // pred_region
      _
    $region25: #{feedforward_vae_forward.1} parent=1 // pred_fallthru
      _
    // Predicated region
    $region26: #{feedforward_vae_forward.1} parent=1 // pred_check
      _
    $region27: #{feedforward_vae_forward.1} parent=1 // pred_check_branch
      %31 = sbr.rel (0) target = $region29
    $region28: #{feedforward_vae_forward.1} parent=1 // pred_region
      _
    $region29: #{feedforward_vae_forward.1} parent=1 // pred_fallthru
      _
    // Predicated region
    $region30: #{feedforward_vae_forward.1} parent=1 // pred_check
      _
    $region31: #{feedforward_vae_forward.1} parent=1 // pred_check_branch
      %33 = sbr.rel (0) target = $region33
    $region32: #{feedforward_vae_forward.1} parent=1 // pred_region
      _
    $region33: #{feedforward_vae_forward.1} parent=1 // pred_fallthru
      _
    // Predicated region
    $region34: #{feedforward_vae_forward.1} parent=1 // pred_check
      _
    $region35: #{feedforward_vae_forward.1} parent=1 // pred_check_branch
      %35 = sbr.rel (0) target = $region37
    $region36: #{feedforward_vae_forward.1} parent=1 // pred_region
      _
    $region37: #{feedforward_vae_forward.1} parent=1 // pred_fallthru
      _
    // Predicated region
    $region38: #{feedforward_vae_forward.1} parent=1 // pred_check
      _
    $region39: #{feedforward_vae_forward.1} parent=1 // pred_check_branch
      %37 = sbr.rel (0) target = $region41
    $region40: #{feedforward_vae_forward.1} parent=1 // pred_region
      _
    $region41: #{feedforward_vae_forward.1} parent=1 // pred_fallthru
      _
    %v39 = vld [vmem:[%s0] sm:$0xf]
    %v40 = vld [vmem:[%s1] sm:$0xff]
    %v41 = vld [vmem:[%s2] sm:$0xf]
    %v42 = vld [vmem:[%s2 + $0x4] sm:$0xf]
    %v43 = vld [vmem:[%s2 + $0x8] sm:$0xf]
    %v44 = vld [vmem:[%s2 + $0xc] sm:$0xf]
    %v45 = vld [vmem:[%s2 + $0x10] sm:$0xf]
    %v46 = vld [vmem:[%s2 + $0x14] sm:$0xf]
    %v47 = vld [vmem:[%s2 + $0x18] sm:$0xf]
    %v48 = vld [vmem:[%s2 + $0x1c] sm:$0xf]
    %v49 = vld [vmem:[%s2 + $0x20] sm:$0xf]
    %v50 = vld [vmem:[%s2 + $0x24] sm:$0xf]
    %v51 = vld [vmem:[%s2 + $0x28] sm:$0xf]
    %v52 = vld [vmem:[%s2 + $0x2c] sm:$0xf]
    %v53 = vld [vmem:[%s2 + $0x30] sm:$0xf]
    %v54 = vld [vmem:[%s2 + $0x34] sm:$0xf]
    %v55 = vld [vmem:[%s2 + $0x38] sm:$0xf]
    %v56 = vld [vmem:[%s2 + $0x3c] sm:$0xf]
    %v57 = vld [vmem:[%s3] sm:$0x1]
    %v59 = vlaneseq
    %v60 = vshrl.u32 %v59, 7
    %v61 = vsub.s32 0, %v60
    %v62 = vrot.slane %v57, %v61
    %v80 = vunpack.c.l.b16 %v41
    %v81 = vunpack.c.l.b16 %v42
    %v82 = vunpack.c.l.b16 %v43
    %v83 = vunpack.c.l.b16 %v44
    %v84 = vunpack.c.l.b16 %v45
    %v85 = vunpack.c.l.b16 %v46
    %v86 = vunpack.c.l.b16 %v47
    %v87 = vunpack.c.l.b16 %v48
    %v88 = vunpack.c.l.b16 %v49
    %v89 = vunpack.c.l.b16 %v50
    %v90 = vunpack.c.l.b16 %v51
    %v91 = vunpack.c.l.b16 %v52
    %v92 = vunpack.c.l.b16 %v53
    %v93 = vunpack.c.l.b16 %v54
    %v94 = vunpack.c.l.b16 %v55
    %v95 = vunpack.c.l.b16 %v56
    %v96 = vpack.c.b16 %v81, %v80
    %v97 = vpack.c.b16 %v83, %v82
    %v98 = vpack.c.b16 %v85, %v84
    %v99 = vpack.c.b16 %v87, %v86
    %v100 = vpack.c.b16 %v89, %v88
    %v101 = vpack.c.b16 %v91, %v90
    %v102 = vpack.c.b16 %v93, %v92
    %v103 = vpack.c.b16 %v95, %v94
    %112 = vmatprep.subr.bf16.mxu0 0
    %113 = vmatpush1.bf16.msra.mxu0 %v103
    %114 = vmatprep.subr.bf16.mxu0 0
    %115 = vmatpush1.bf16.msra.mxu0 %v102
    %116 = vmatprep.subr.bf16.mxu0 0
    %117 = vmatpush1.bf16.msra.mxu0 %v101
    %118 = vmatprep.subr.bf16.mxu0 0
    %119 = vmatpush1.bf16.msra.mxu0 %v100
    %120 = vmatprep.subr.bf16.mxu0 0
    %121 = vmatpush1.bf16.msra.mxu0 %v99
    %122 = vmatprep.subr.bf16.mxu0 0
    %123 = vmatpush1.bf16.msra.mxu0 %v98
    %124 = vmatprep.subr.bf16.mxu0 0
    %125 = vmatpush1.bf16.msra.mxu0 %v97
    %126 = vmatprep.subr.bf16.mxu0 0
    %127 = vmatpush1.bf16.msra.mxu0 %v96
    %128 = vmatprep.subr.bf16.mxu0 0
    %129 = vmatpush2.bf16.msra.mxu0 0
    %130 = vmatprep.subr.bf16.mxu0 0
    %131 = vmatpush2.bf16.msra.mxu0 0
    %132 = vmatprep.subr.bf16.mxu0 0
    %133 = vmatpush2.bf16.msra.mxu0 0
    %134 = vmatprep.subr.bf16.mxu0 0
    %135 = vmatpush2.bf16.msra.mxu0 0
    %136 = vmatprep.subr.bf16.mxu0 0
    %137 = vmatpush2.bf16.msra.mxu0 0
    %138 = vmatprep.subr.bf16.mxu0 0
    %139 = vmatpush2.bf16.msra.mxu0 0
    %140 = vmatprep.subr.bf16.mxu0 0
    %141 = vmatpush2.bf16.msra.mxu0 0
    %142 = vmatprep.subr.bf16.mxu0 0
    %143 = vmatpush2.bf16.msra.mxu0 0
    %144 = vmatprep.mubr.bf16.mxu0 0
    %145 = vmatmul.mubr.bf16.gmra.mxu0 %v39
    %v146 = vpop.f32.mrf.mxu0
    %v147 = vadd.f32 %v62, %v146
    %v148 = vpop.f32.mrf.mxu0
    %v149 = vpop.f32.mrf.mxu0
    %v150 = vpop.f32.mrf.mxu0
    %151 = vdwg.mxu0
    %v152 = vmul.f32 %v147, 0.2
    %v153 = vmax.f32 %v147, %v152
    %v154 = vpack.c.bf16 %v153, %v153
    %v155 = vld [vmem:[%s4] sm:$0xff]
    %v156 = vld [vmem:[%s4 + $0x8] sm:$0xff]
    %v157 = vld [vmem:[%s4 + $0x10] sm:$0xff]
    %v158 = vld [vmem:[%s4 + $0x18] sm:$0xff]
    %v159 = vld [vmem:[%s4 + $0x20] sm:$0xff]
    %v160 = vld [vmem:[%s4 + $0x28] sm:$0xff]
    %v161 = vld [vmem:[%s4 + $0x30] sm:$0xff]
    %v162 = vld [vmem:[%s4 + $0x38] sm:$0xff]
    %v163 = vld [vmem:[%s4 + $0x40] sm:$0xff]
    %v164 = vld [vmem:[%s4 + $0x48] sm:$0xff]
    %v165 = vld [vmem:[%s4 + $0x50] sm:$0xff]
    %v166 = vld [vmem:[%s4 + $0x58] sm:$0xff]
    %v167 = vld [vmem:[%s4 + $0x60] sm:$0xff]
    %v168 = vld [vmem:[%s4 + $0x68] sm:$0xff]
    %v169 = vld [vmem:[%s4 + $0x70] sm:$0xff]
    %v170 = vld [vmem:[%s4 + $0x78] sm:$0xff]
    %v171 = vld [vmem:[%s5] sm:$0x3]
    %v173 = vlaneseq
    %v174 = vshrl.u32 %v173, 7
    %v175 = vsub.s32 0, %v174
    %v176 = vrot.slane %v171, %v175
    %v177 = vlaneseq
    %v178 = vshrl.u32 %v177, 7
    %v179 = vsub.s32 1, %v178
    %v180 = vrot.slane %v171, %v179
    %v199 = vunpack.c.l.b16 %v155
    %v200 = vunpack.c.h.b16 %v155
    %v201 = vunpack.c.l.b16 %v156
    %v202 = vunpack.c.h.b16 %v156
    %v203 = vunpack.c.l.b16 %v157
    %v204 = vunpack.c.h.b16 %v157
    %v205 = vunpack.c.l.b16 %v158
    %v206 = vunpack.c.h.b16 %v158
    %v207 = vunpack.c.l.b16 %v159
    %v208 = vunpack.c.h.b16 %v159
    %v209 = vunpack.c.l.b16 %v160
    %v210 = vunpack.c.h.b16 %v160
    %v211 = vunpack.c.l.b16 %v161
    %v212 = vunpack.c.h.b16 %v161
    %v213 = vunpack.c.l.b16 %v162
    %v214 = vunpack.c.h.b16 %v162
    %v215 = vunpack.c.l.b16 %v163
    %v216 = vunpack.c.h.b16 %v163
    %v217 = vunpack.c.l.b16 %v164
    %v218 = vunpack.c.h.b16 %v164
    %v219 = vunpack.c.l.b16 %v165
    %v220 = vunpack.c.h.b16 %v165
    %v221 = vunpack.c.l.b16 %v166
    %v222 = vunpack.c.h.b16 %v166
    %v223 = vunpack.c.l.b16 %v167
    %v224 = vunpack.c.h.b16 %v167
    %v225 = vunpack.c.l.b16 %v168
    %v226 = vunpack.c.h.b16 %v168
    %v227 = vunpack.c.l.b16 %v169
    %v228 = vunpack.c.h.b16 %v169
    %v229 = vunpack.c.l.b16 %v170
    %v230 = vunpack.c.h.b16 %v170
    %v231 = vpack.c.b16 %v201, %v199
    %v232 = vpack.c.b16 %v202, %v200
    %v233 = vpack.c.b16 %v205, %v203
    %v234 = vpack.c.b16 %v206, %v204
    %v235 = vpack.c.b16 %v209, %v207
    %v236 = vpack.c.b16 %v210, %v208
    %v237 = vpack.c.b16 %v213, %v211
    %v238 = vpack.c.b16 %v214, %v212
    %v239 = vpack.c.b16 %v217, %v215
    %v240 = vpack.c.b16 %v218, %v216
    %v241 = vpack.c.b16 %v221, %v219
    %v242 = vpack.c.b16 %v222, %v220
    %v243 = vpack.c.b16 %v225, %v223
    %v244 = vpack.c.b16 %v226, %v224
    %v245 = vpack.c.b16 %v229, %v227
    %v246 = vpack.c.b16 %v230, %v228
    %263 = vmatprep.subr.bf16.mxu0 %v246
    %264 = vmatpush1.bf16.msra.mxu0 %v245
    %265 = vmatprep.subr.bf16.mxu0 %v244
    %266 = vmatpush1.bf16.msra.mxu0 %v243
    %267 = vmatprep.subr.bf16.mxu0 %v242
    %268 = vmatpush1.bf16.msra.mxu0 %v241
    %269 = vmatprep.subr.bf16.mxu0 %v240
    %270 = vmatpush1.bf16.msra.mxu0 %v239
    %271 = vmatprep.subr.bf16.mxu0 %v238
    %272 = vmatpush1.bf16.msra.mxu0 %v237
    %273 = vmatprep.subr.bf16.mxu0 %v236
    %274 = vmatpush1.bf16.msra.mxu0 %v235
    %275 = vmatprep.subr.bf16.mxu0 %v234
    %276 = vmatpush1.bf16.msra.mxu0 %v233
    %277 = vmatprep.subr.bf16.mxu0 %v232
    %278 = vmatpush1.bf16.msra.mxu0 %v231
    %279 = vmatprep.subr.bf16.mxu0 0
    %280 = vmatpush2.bf16.msra.mxu0 0
    %281 = vmatprep.subr.bf16.mxu0 0
    %282 = vmatpush2.bf16.msra.mxu0 0
    %283 = vmatprep.subr.bf16.mxu0 0
    %284 = vmatpush2.bf16.msra.mxu0 0
    %285 = vmatprep.subr.bf16.mxu0 0
    %286 = vmatpush2.bf16.msra.mxu0 0
    %287 = vmatprep.subr.bf16.mxu0 0
    %288 = vmatpush2.bf16.msra.mxu0 0
    %289 = vmatprep.subr.bf16.mxu0 0
    %290 = vmatpush2.bf16.msra.mxu0 0
    %291 = vmatprep.subr.bf16.mxu0 0
    %292 = vmatpush2.bf16.msra.mxu0 0
    %293 = vmatprep.subr.bf16.mxu0 0
    %294 = vmatpush2.bf16.msra.mxu0 0
    %295 = vmatprep.mubr.bf16.mxu0 0
    %296 = vmatmul.mubr.bf16.gmra.mxu0 %v154
    %v297 = vpop.f32.mrf.mxu0
    %v298 = vadd.f32 %v176, %v297
    %v299 = vpop.f32.mrf.mxu0
    %v300 = vadd.f32 %v180, %v299
    %v301 = vpop.f32.mrf.mxu0
    %v302 = vpop.f32.mrf.mxu0
    %303 = vdwg.mxu0
    %v304 = vmul.f32 %v300, 1.442695
    %v305 = vpow.pop %v304
    %v306 = vmax.f32 %v300, 0.0
    %v307 = vrcp.pop %v305
    %v308 = vmul.f32 1.0, %v307
    %v309 = vmin.f32 %v305, %v308
    %v310 = vadd.f32 %v309, 1.0
    %v311 = vlog2.pop %v310
    %v312 = vmul.f32 %v311, 0.6931472
    %v313 = vmul.f32 -0.5, %v309
    %v314 = vadd.f32 %v313, 1.0
    %v315 = vmul.f32 %v314, %v309
    %v316 = vand.u32 2147483647, %v309
    %vm317 = vcmp.lt.f32.partialorder %v316, 0.0004427343
    %v318 = vsel %vm317, %v315, %v312
    %v319 = vadd.f32 %v306, %v318
    %v320 = vadd.f32 %v319, 1e-05
    %v321 = vmul.f32 %v40, %v320
    %v322 = vadd.f32 %v298, %v321
    %v323 = vadd.f32 %v300, 1.0
    %v324 = vmul.f32 %v298, %v298
    %v325 = vsub.f32 %v323, %v324
    %v326 = vsub.f32 %v325, %v305
    %327 = vmatprep.subr.mxu0 0.0
    %328 = vmatpush1.xpose.msra.mxu0 0.0
    %329 = vmatprep.subr.mxu0 0.0
    %330 = vmatpush1.xpose.msra.mxu0 0.0
    %331 = vmatprep.subr.mxu0 0.0
    %332 = vmatpush1.xpose.msra.mxu0 0.0
    %333 = vmatprep.subr.mxu0 0.0
    %334 = vmatpush1.xpose.msra.mxu0 0.0
    %335 = vmatprep.subr.mxu0 0.0
    %336 = vmatpush1.xpose.msra.mxu0 0.0
    %337 = vmatprep.subr.mxu0 0.0
    %338 = vmatpush1.xpose.msra.mxu0 0.0
    %339 = vmatprep.subr.mxu0 0.0
    %340 = vmatpush1.xpose.msra.mxu0 0.0
    %341 = vmatprep.subr.mxu0 0.0
    %342 = vmatpush1.xpose.msra.mxu0 0.0
    %343 = vmatprep.subr.mxu0 0.0
    %344 = vmatpush1.xpose.msra.mxu0 0.0
    %345 = vmatprep.subr.mxu0 0.0
    %346 = vmatpush1.xpose.msra.mxu0 0.0
    %347 = vmatprep.subr.mxu0 0.0
    %348 = vmatpush1.xpose.msra.mxu0 0.0
    %349 = vmatprep.subr.mxu0 0.0
    %350 = vmatpush1.xpose.msra.mxu0 0.0
    %351 = vmatprep.subr.mxu0 0.0
    %352 = vmatpush1.xpose.msra.mxu0 0.0
    %353 = vmatprep.subr.mxu0 0.0
    %354 = vmatpush1.xpose.msra.mxu0 0.0
    %355 = vmatprep.subr.mxu0 0.0
    %356 = vmatpush1.xpose.msra.mxu0 0.0
    %357 = vmatprep.subr.mxu0 0.0
    %358 = vmatpush1.xpose.msra.mxu0 %v326
    %359 = vmatprep.subr.mxu0 0.0
    %360 = vmatpush2.xpose.msra.mxu0 0.0
    %361 = vmatprep.subr.mxu0 0.0
    %362 = vmatpush2.xpose.msra.mxu0 0.0
    %363 = vmatprep.subr.mxu0 0.0
    %364 = vmatpush2.xpose.msra.mxu0 0.0
    %365 = vmatprep.subr.mxu0 0.0
    %366 = vmatpush2.xpose.msra.mxu0 0.0
    %367 = vmatprep.subr.mxu0 0.0
    %368 = vmatpush2.xpose.msra.mxu0 0.0
    %369 = vmatprep.subr.mxu0 0.0
    %370 = vmatpush2.xpose.msra.mxu0 0.0
    %371 = vmatprep.subr.mxu0 0.0
    %372 = vmatpush2.xpose.msra.mxu0 0.0
    %373 = vmatprep.subr.mxu0 0.0
    %374 = vmatpush2.xpose.msra.mxu0 0.0
    %375 = vmatprep.subr.mxu0 0.0
    %376 = vmatpush2.xpose.msra.mxu0 0.0
    %377 = vmatprep.subr.mxu0 0.0
    %378 = vmatpush2.xpose.msra.mxu0 0.0
    %379 = vmatprep.subr.mxu0 0.0
    %380 = vmatpush2.xpose.msra.mxu0 0.0
    %381 = vmatprep.subr.mxu0 0.0
    %382 = vmatpush2.xpose.msra.mxu0 0.0
    %383 = vmatprep.subr.mxu0 0.0
    %384 = vmatpush2.xpose.msra.mxu0 0.0
    %385 = vmatprep.subr.mxu0 0.0
    %386 = vmatpush2.xpose.msra.mxu0 0.0
    %387 = vmatprep.subr.mxu0 0.0
    %388 = vmatpush2.xpose.msra.mxu0 0.0
    %389 = vmatprep.subr.mxu0 0.0
    %390 = vmatpush2.xpose.msra.mxu0 0.0
    %391 = vmatprep.mubr.f32.mxu0 0.0
    %392 = vmatmul.mubr.f32.gmra.mxu0 1.0
    %v393 = vpop.f32.mrf.mxu0
    %v394 = vadd.f32 0.0, %v393
    %v395 = vpop.f32.mrf.mxu0
    %396 = vdwg.mxu0
    %v397 = vmul.f32 %v394, -0.5
    %vm398 = vcmask 64512
    %399 = vst.msk [vmem:[%s11] sm:$0xff] %vm398, %v397
    %v400 = vpack.c.bf16 %v322, %v322
    %v401 = vld [vmem:[%s6] sm:$0xf]
    %v402 = vld [vmem:[%s6 + $0x4] sm:$0xf]
    %v403 = vld [vmem:[%s6 + $0x8] sm:$0xf]
    %v404 = vld [vmem:[%s6 + $0xc] sm:$0xf]
    %v405 = vld [vmem:[%s6 + $0x10] sm:$0xf]
    %v406 = vld [vmem:[%s6 + $0x14] sm:$0xf]
    %v407 = vld [vmem:[%s6 + $0x18] sm:$0xf]
    %v408 = vld [vmem:[%s6 + $0x1c] sm:$0xf]
    %v409 = vld [vmem:[%s6 + $0x20] sm:$0xf]
    %v410 = vld [vmem:[%s6 + $0x24] sm:$0xf]
    %v411 = vld [vmem:[%s6 + $0x28] sm:$0xf]
    %v412 = vld [vmem:[%s6 + $0x2c] sm:$0xf]
    %v413 = vld [vmem:[%s6 + $0x30] sm:$0xf]
    %v414 = vld [vmem:[%s6 + $0x34] sm:$0xf]
    %v415 = vld [vmem:[%s6 + $0x38] sm:$0xf]
    %v416 = vld [vmem:[%s6 + $0x3c] sm:$0xf]
    %v417 = vld [vmem:[%s7] sm:$0x1]
    %v419 = vlaneseq
    %v420 = vshrl.u32 %v419, 7
    %v421 = vsub.s32 0, %v420
    %v422 = vrot.slane %v417, %v421
    %v440 = vunpack.c.l.b16 %v401
    %v441 = vunpack.c.l.b16 %v402
    %v442 = vunpack.c.l.b16 %v403
    %v443 = vunpack.c.l.b16 %v404
    %v444 = vunpack.c.l.b16 %v405
    %v445 = vunpack.c.l.b16 %v406
    %v446 = vunpack.c.l.b16 %v407
    %v447 = vunpack.c.l.b16 %v408
    %v448 = vunpack.c.l.b16 %v409
    %v449 = vunpack.c.l.b16 %v410
    %v450 = vunpack.c.l.b16 %v411
    %v451 = vunpack.c.l.b16 %v412
    %v452 = vunpack.c.l.b16 %v413
    %v453 = vunpack.c.l.b16 %v414
    %v454 = vunpack.c.l.b16 %v415
    %v455 = vunpack.c.l.b16 %v416
    %v456 = vpack.c.b16 %v441, %v440
    %v457 = vpack.c.b16 %v443, %v442
    %v458 = vpack.c.b16 %v445, %v444
    %v459 = vpack.c.b16 %v447, %v446
    %v460 = vpack.c.b16 %v449, %v448
    %v461 = vpack.c.b16 %v451, %v450
    %v462 = vpack.c.b16 %v453, %v452
    %v463 = vpack.c.b16 %v455, %v454
    %472 = vmatprep.subr.bf16.mxu0 0
    %473 = vmatpush1.bf16.msra.mxu0 %v463
    %474 = vmatprep.subr.bf16.mxu0 0
    %475 = vmatpush1.bf16.msra.mxu0 %v462
    %476 = vmatprep.subr.bf16.mxu0 0
    %477 = vmatpush1.bf16.msra.mxu0 %v461
    %478 = vmatprep.subr.bf16.mxu0 0
    %479 = vmatpush1.bf16.msra.mxu0 %v460
    %480 = vmatprep.subr.bf16.mxu0 0
    %481 = vmatpush1.bf16.msra.mxu0 %v459
    %482 = vmatprep.subr.bf16.mxu0 0
    %483 = vmatpush1.bf16.msra.mxu0 %v458
    %484 = vmatprep.subr.bf16.mxu0 0
    %485 = vmatpush1.bf16.msra.mxu0 %v457
    %486 = vmatprep.subr.bf16.mxu0 0
    %487 = vmatpush1.bf16.msra.mxu0 %v456
    %488 = vmatprep.subr.bf16.mxu0 0
    %489 = vmatpush2.bf16.msra.mxu0 0
    %490 = vmatprep.subr.bf16.mxu0 0
    %491 = vmatpush2.bf16.msra.mxu0 0
    %492 = vmatprep.subr.bf16.mxu0 0
    %493 = vmatpush2.bf16.msra.mxu0 0
    %494 = vmatprep.subr.bf16.mxu0 0
    %495 = vmatpush2.bf16.msra.mxu0 0
    %496 = vmatprep.subr.bf16.mxu0 0
    %497 = vmatpush2.bf16.msra.mxu0 0
    %498 = vmatprep.subr.bf16.mxu0 0
    %499 = vmatpush2.bf16.msra.mxu0 0
    %500 = vmatprep.subr.bf16.mxu0 0
    %501 = vmatpush2.bf16.msra.mxu0 0
    %502 = vmatprep.subr.bf16.mxu0 0
    %503 = vmatpush2.bf16.msra.mxu0 0
    %504 = vmatprep.mubr.bf16.mxu0 0
    %505 = vmatmul.mubr.bf16.gmra.mxu0 %v400
    %v506 = vpop.f32.mrf.mxu0
    %v507 = vadd.f32 %v422, %v506
    %v508 = vpop.f32.mrf.mxu0
    %v509 = vpop.f32.mrf.mxu0
    %v510 = vpop.f32.mrf.mxu0
    %511 = vdwg.mxu0
    %v512 = vmul.f32 %v507, 0.2
    %v513 = vmax.f32 %v507, %v512
    %v514 = vpack.c.bf16 %v513, %v513
    %v515 = vld [vmem:[%s8] sm:$0xf]
    %v516 = vld [vmem:[%s8 + $0x4] sm:$0xf]
    %v517 = vld [vmem:[%s8 + $0x8] sm:$0xf]
    %v518 = vld [vmem:[%s8 + $0xc] sm:$0xf]
    %v519 = vld [vmem:[%s8 + $0x10] sm:$0xf]
    %v520 = vld [vmem:[%s8 + $0x14] sm:$0xf]
    %v521 = vld [vmem:[%s8 + $0x18] sm:$0xf]
    %v522 = vld [vmem:[%s8 + $0x1c] sm:$0xf]
    %v523 = vld [vmem:[%s8 + $0x20] sm:$0xf]
    %v524 = vld [vmem:[%s8 + $0x24] sm:$0xf]
    %v525 = vld [vmem:[%s8 + $0x28] sm:$0xf]
    %v526 = vld [vmem:[%s8 + $0x2c] sm:$0xf]
    %v527 = vld [vmem:[%s8 + $0x30] sm:$0xf]
    %v528 = vld [vmem:[%s8 + $0x34] sm:$0xf]
    %v529 = vld [vmem:[%s8 + $0x38] sm:$0xf]
    %v530 = vld [vmem:[%s8 + $0x3c] sm:$0xf]
    %v531 = vld [vmem:[%s9] sm:$0x1]
    %v533 = vlaneseq
    %v534 = vshrl.u32 %v533, 7
    %v535 = vsub.s32 0, %v534
    %v536 = vrot.slane %v531, %v535
    %v554 = vunpack.c.l.b16 %v515
    %v555 = vunpack.c.l.b16 %v516
    %v556 = vunpack.c.l.b16 %v517
    %v557 = vunpack.c.l.b16 %v518
    %v558 = vunpack.c.l.b16 %v519
    %v559 = vunpack.c.l.b16 %v520
    %v560 = vunpack.c.l.b16 %v521
    %v561 = vunpack.c.l.b16 %v522
    %v562 = vunpack.c.l.b16 %v523
    %v563 = vunpack.c.l.b16 %v524
    %v564 = vunpack.c.l.b16 %v525
    %v565 = vunpack.c.l.b16 %v526
    %v566 = vunpack.c.l.b16 %v527
    %v567 = vunpack.c.l.b16 %v528
    %v568 = vunpack.c.l.b16 %v529
    %v569 = vunpack.c.l.b16 %v530
    %v570 = vpack.c.b16 %v555, %v554
    %v571 = vpack.c.b16 %v557, %v556
    %v572 = vpack.c.b16 %v559, %v558
    %v573 = vpack.c.b16 %v561, %v560
    %v574 = vpack.c.b16 %v563, %v562
    %v575 = vpack.c.b16 %v565, %v564
    %v576 = vpack.c.b16 %v567, %v566
    %v577 = vpack.c.b16 %v569, %v568
    %586 = vmatprep.subr.bf16.mxu0 0
    %587 = vmatpush1.bf16.msra.mxu0 %v577
    %588 = vmatprep.subr.bf16.mxu0 0
    %589 = vmatpush1.bf16.msra.mxu0 %v576
    %590 = vmatprep.subr.bf16.mxu0 0
    %591 = vmatpush1.bf16.msra.mxu0 %v575
    %592 = vmatprep.subr.bf16.mxu0 0
    %593 = vmatpush1.bf16.msra.mxu0 %v574
    %594 = vmatprep.subr.bf16.mxu0 0
    %595 = vmatpush1.bf16.msra.mxu0 %v573
    %596 = vmatprep.subr.bf16.mxu0 0
    %597 = vmatpush1.bf16.msra.mxu0 %v572
    %598 = vmatprep.subr.bf16.mxu0 0
    %599 = vmatpush1.bf16.msra.mxu0 %v571
    %600 = vmatprep.subr.bf16.mxu0 0
    %601 = vmatpush1.bf16.msra.mxu0 %v570
    %602 = vmatprep.subr.bf16.mxu0 0
    %603 = vmatpush2.bf16.msra.mxu0 0
    %604 = vmatprep.subr.bf16.mxu0 0
    %605 = vmatpush2.bf16.msra.mxu0 0
    %606 = vmatprep.subr.bf16.mxu0 0
    %607 = vmatpush2.bf16.msra.mxu0 0
    %608 = vmatprep.subr.bf16.mxu0 0
    %609 = vmatpush2.bf16.msra.mxu0 0
    %610 = vmatprep.subr.bf16.mxu0 0
    %611 = vmatpush2.bf16.msra.mxu0 0
    %612 = vmatprep.subr.bf16.mxu0 0
    %613 = vmatpush2.bf16.msra.mxu0 0
    %614 = vmatprep.subr.bf16.mxu0 0
    %615 = vmatpush2.bf16.msra.mxu0 0
    %616 = vmatprep.subr.bf16.mxu0 0
    %617 = vmatpush2.bf16.msra.mxu0 0
    %618 = vmatprep.mubr.bf16.mxu0 0
    %619 = vmatmul.mubr.bf16.gmra.mxu0 %v514
    %v620 = vpop.f32.mrf.mxu0
    %v621 = vadd.f32 %v536, %v620
    %v622 = vpop.f32.mrf.mxu0
    %v623 = vpop.f32.mrf.mxu0
    %v624 = vpop.f32.mrf.mxu0
    %625 = vdwg.mxu0
    %626 = vst [vmem:[#allocation2] sm:$0xff] %v621
    // Predicated region
    $region42: #{feedforward_vae_forward.1} parent=1 // pred_check
      _
    $region43: #{feedforward_vae_forward.1} parent=1 // pred_check_branch
      %628 = sbr.rel (0) target = $region45
    $region44: #{feedforward_vae_forward.1} parent=1 // pred_region
      %s630 = ssub.s32 128, 128
      %631 = vsyncadd [#allocation3], %s630
      %s633 = sshll.u32 [#allocation2], 4
      %s634 = int_to_ptr.vmem [resolvable:$true] %s633
      %636 = dma.vmem_to_hbm [thread:$0]  %s634, 128, %s10, [#allocation3]
    $region45: #{feedforward_vae_forward.1} parent=1 // pred_fallthru
      _
    // Predicated region
    $region46: #{feedforward_vae_forward.1} parent=1 // pred_check
      _
    $region47: #{feedforward_vae_forward.1} parent=1 // pred_check_branch
      %638 = sbr.rel (0) target = $region49
    $region48: #{feedforward_vae_forward.1} parent=1 // pred_region
      _
    $region49: #{feedforward_vae_forward.1} parent=1 // pred_fallthru
      _
    // Predicated region
    $region50: #{feedforward_vae_forward.1} parent=1 // pred_check
      _
    $region51: #{feedforward_vae_forward.1} parent=1 // pred_check_branch
      %640 = sbr.rel (0) target = $region53
    $region52: #{feedforward_vae_forward.1} parent=1 // pred_region
      %641 = dma.done [#allocation3], 128
    $region53: #{feedforward_vae_forward.1} parent=1 // pred_fallthru
      _
    // Predicated region
    $region54: #{feedforward_vae_forward.1} parent=1 // pred_check
      _
    $region55: #{feedforward_vae_forward.1} parent=1 // pred_check_branch
      %643 = sbr.rel (0) target = $region57
    $region56: #{feedforward_vae_forward.1} parent=1 // pred_region
      _
    $region57: #{feedforward_vae_forward.1} parent=1 // pred_fallthru
      _
    %644 = vsyncpa [#allocation3], 1

</llo_original>
